<compile_context>
chip_gen: v7x
topology: tpu7x:2x2x1
jax: 0.10.0
libtpu: 0.0.40
codegen_flags: <defaults>
</compile_context>

<pallas_src>
import functools
import math

import jax
import jax.numpy as jnp
from jax import lax
from jax.experimental import pallas as pl
from jax.experimental.pallas import tpu as pltpu


# A (M, K) x B (N, K) -> (M, N): contract over the last axis of both operands.
_NT_DIMS = (((1,), (1,)), ((), ()))


def _cnn1_kernel(x_ref, w1_ref, b1_ref, w2_ref, b2_ref, wf_ref, bf_ref, o_ref):
    """Fused CNN1 forward on one batch tile.

    x_ref  : (TB, S)     input tile in native (batch, seq) layout
    w1_ref : (K*32, S)   banded conv1 weights, row index = h*32 + c
    b1_ref : (K*32, 1)   f32
    w2_ref : (64, K*32)  conv2 weights, column index = h*32 + c1
    b2_ref : (64, 1)     f32
    wf_ref : (OUT, 64)   1x1 conv weights
    bf_ref : (OUT, 1)    f32
    o_ref  : (OUT, TB)   lane-dense output tile (batch in lanes)
    """
    x = x_ref[...].astype(w1_ref.dtype)        # optional bf16 MXU operand cast

    # conv1: banded matmul, contract over S (last axis of both) -> (K*32, TB)
    h1 = lax.dot_general(w1_ref[...], x, _NT_DIMS,
                         preferred_element_type=jnp.float32)
    h1 = jnp.maximum(h1 + b1_ref[...], 0.0)

    # conv2: full reduction over (h, c1) -> (64, TB)
    h2 = jnp.dot(w2_ref[...], h1.astype(w2_ref.dtype),
                 preferred_element_type=jnp.float32)
    h2 = jnp.maximum(h2 + b2_ref[...], 0.0)

    # conv_final 1x1 (no activation) -> (OUT, TB), lane-dense store.
    o_ref[...] = jnp.dot(wf_ref[...], h2.astype(wf_ref.dtype),
                         preferred_element_type=jnp.float32) + bf_ref[...]


def prepare_params(params, *, seq_len: int, out: int, use_bf16: bool = False):
    """One-time weight prep (hoisted out of the per-call path)."""
    S = seq_len
    K = (S - 1) // 2 + 1
    w1, b1, w2, b2, wf, bf = params
    wdt = jnp.bfloat16 if use_bf16 else jnp.float32

    # Banded conv1 weight: W1_band[h*32 + c, s] = w1[c, s - h] (valid window).
    w1m = w1.reshape(32, K).astype(jnp.float32)                  # (32, K)
    band = jnp.zeros((K, 32, S), jnp.float32)
    for h in range(K):                                           # K small, static
        band = band.at[h, :, h:h + K].set(w1m)
    w1_t = band.reshape(K * 32, S).astype(wdt)                   # (K*32, S)
    b1_t = jnp.tile(b1.reshape(32), (K,)).reshape(K * 32, 1).astype(jnp.float32)

    # conv2 weight (64, 32, K, 1): column order h*32 + c1 to match h1 rows.
    w2_t = jnp.transpose(w2.reshape(64, 32, K), (0, 2, 1)).reshape(64, K * 32)
    w2_t = w2_t.astype(wdt)
    b2_t = b2.reshape(64, 1).astype(jnp.float32)
    wf_t = wf.reshape(out, 64).astype(wdt)
    bf_t = bf.reshape(out, 1).astype(jnp.float32)
    return (w1_t, b1_t, w2_t, b2_t, wf_t, bf_t)


def _round_up(x: int, m: int) -> int:
    return -(-x // m) * m


def _pick_tile_b(B: int, target: int) -> int:
    """Batch tile: big enough to amortize per-step overhead, multiple of 128
    (lane-dense (OUT, TB) output blocks), and capped so the grid stays >= 2
    when possible (v7x has 2 TensorCores)."""
    if B < 128:
        return B                               # single block == full dims
    tb = min(_round_up(target, 128), _round_up(-(-B // 2), 128))
    return max(tb, 128)


def pt_mdl_cnn1_forward(x, prepped_params, *, seq_len: int, out: int,
                        tile_b: int = 1024):
    """Pallas-backed forward. x: (B, seq_len) -> (B, out)."""
    assert (seq_len - 1) % 2 == 0, f"seq_len ({seq_len}) must be odd"
    S = seq_len
    K = (S - 1) // 2 + 1
    w1_t, b1_t, w2_t, b2_t, wf_t, bf_t = prepped_params
    B = x.shape[0]
    assert x.shape[1] == S

    TB = _pick_tile_b(B, tile_b)
    grid = (pl.cdiv(B, TB),)                   # ragged last block: no HBM pad

    flops = 2 * B * (K * 32 * S + 64 * K * 32 + out * 64)
    bytes_accessed = int(
        B * S * 4 + B * out * 4
        + sum(int(w.size) * w.dtype.itemsize for w in prepped_params)
    )
    cost = pl.CostEstimate(flops=flops, transcendentals=0,
                           bytes_accessed=bytes_accessed)

    res = pl.pallas_call(
        _cnn1_kernel,
        out_shape=jax.ShapeDtypeStruct((out, B), jnp.float32),
        grid_spec=pltpu.PrefetchScalarGridSpec(
            num_scalar_prefetch=0,
            grid=grid,
            in_specs=[
                pl.BlockSpec((TB, S), lambda i: (i, 0)),          # x (native layout)
                pl.BlockSpec((K * 32, S), lambda i: (0, 0)),      # w1 (resident)
                pl.BlockSpec((K * 32, 1), lambda i: (0, 0)),      # b1
                pl.BlockSpec((64, K * 32), lambda i: (0, 0)),     # w2
                pl.BlockSpec((64, 1), lambda i: (0, 0)),          # b2
                pl.BlockSpec((out, 64), lambda i: (0, 0)),        # wf
                pl.BlockSpec((out, 1), lambda i: (0, 0)),         # bf
            ],
            out_specs=pl.BlockSpec((out, TB), lambda i: (0, i)),
        ),
        compiler_params=pltpu.CompilerParams(
            dimension_semantics=("parallel",),   # v7x: shard batch over 2 TCs
            vmem_limit_bytes=32 * 1024 * 1024,   # ~1 MB used at TB=1024
        ),
        cost_estimate=cost,
    )(x.astype(jnp.float32), w1_t, b1_t, w2_t, b2_t, wf_t, bf_t)

    # back to (B, OUT); output is tiny (out*B*4 B) so this transpose is cheap
    return jnp.transpose(res)


def init_params(key, *, seq_len: int, out: int):
    """Deterministic init mirroring init_layer (uniform(-scale, scale), bias=0)."""
    K = (seq_len - 1) // 2 + 1

    def uinit(k, shape, fan_in):
        std = math.sqrt(2.0 / fan_in)
        scale = std * math.sqrt(3.0)
        return jax.random.uniform(k, shape, jnp.float32, -scale, scale)

    k1, k2, k3 = jax.random.split(key, 3)
    w1 = uinit(k1, (32, 1, K, 1), 1 * K * 1)
    b1 = jnp.zeros((32,), jnp.float32)
    w2 = uinit(k2, (64, 32, K, 1), 32 * K * 1)
    b2 = jnp.zeros((64,), jnp.float32)
    wf = uinit(k3, (out, 64, 1, 1), 64 * 1 * 1)
    bf = jnp.zeros((out,), jnp.float32)
    return (w1, b1, w2, b2, wf, bf)


def reference_forward(x, params, *, seq_len: int, out: int):
    """Pure-JAX reference of the PyTorch forward (sanity check)."""
    K = (seq_len - 1) // 2 + 1
    w1, b1, w2, b2, wf, bf = params
    B = x.shape[0]
    w1m = w1.reshape(32, K)
    y1 = jnp.stack(
        [x[:, h:h + K] @ w1m.T for h in range(K)], axis=2
    ) + b1[None, :, None]                       # (B, 32, K)
    y1 = jnp.maximum(y1, 0.0)
    w2m = w2.reshape(64, 32 * K)
    y2 = jnp.maximum(y1.reshape(B, 32 * K) @ w2m.T + b2, 0.0)
    return y2 @ wf.reshape(out, 64).T + bf


if __name__ == "__main__":
    SEQ_LEN = 9      # must be odd -> K = 5
    OUT = 8
    B = 200          # non-multiple of 128: exercises ragged last block + 2-step grid

    key = jax.random.PRNGKey(0)
    kx, kp = jax.random.split(key)
    x = jax.random.normal(kx, (B, SEQ_LEN), dtype=jnp.float32)
    params = init_params(kp, seq_len=SEQ_LEN, out=OUT)

    # One-time weight prep (hoisted); forward is jitted so any remaining glue
    # around the pallas_call is constant-folded / fused by XLA.
    prepped = prepare_params(params, seq_len=SEQ_LEN, out=OUT, use_bf16=False)
    fwd = jax.jit(functools.partial(pt_mdl_cnn1_forward, seq_len=SEQ_LEN, out=OUT))

    y = jax.block_until_ready(fwd(x, prepped))

    y_ref = reference_forward(x, params, seq_len=SEQ_LEN, out=OUT)
    assert y.shape == (B, OUT)
    assert jnp.allclose(y, y_ref, atol=1e-4, rtol=1e-4), "mismatch vs reference"

    print("KERNEL_OK")
</pallas_src>

<mosaic_0001>
module attributes {stable_mosaic.version = 11 : i64} {
  func.func @_cnn1_kernel(%arg0: i32, %arg1: memref<128x9xf32, #tpu.memory_space<vmem>>, %arg2: memref<160x9xf32, #tpu.memory_space<vmem>>, %arg3: memref<160x1xf32, #tpu.memory_space<vmem>>, %arg4: memref<64x160xf32, #tpu.memory_space<vmem>>, %arg5: memref<64x1xf32, #tpu.memory_space<vmem>>, %arg6: memref<8x64xf32, #tpu.memory_space<vmem>>, %arg7: memref<8x1xf32, #tpu.memory_space<vmem>>, %arg8: memref<8x128xf32, #tpu.memory_space<vmem>>) attributes {dimension_semantics = [#tpu.dimension_semantics<parallel>], iteration_bounds = array<i64: 2>, scalar_prefetch = 0 : i64, scratch_operands = 0 : i64, tpu.core_type = #tpu.core_type<tc>, window_params = [{transform_indices = @transform_0, window_bounds = array<i64: 128, 9>}, {pipeline_mode = #tpu.pipeline_mode<synchronous>, transform_indices = @transform_1, window_bounds = array<i64: 160, 9>}, {pipeline_mode = #tpu.pipeline_mode<synchronous>, transform_indices = @transform_2, window_bounds = array<i64: 160, 1>}, {pipeline_mode = #tpu.pipeline_mode<synchronous>, transform_indices = @transform_3, window_bounds = array<i64: 64, 160>}, {pipeline_mode = #tpu.pipeline_mode<synchronous>, transform_indices = @transform_4, window_bounds = array<i64: 64, 1>}, {pipeline_mode = #tpu.pipeline_mode<synchronous>, transform_indices = @transform_5, window_bounds = array<i64: 8, 64>}, {pipeline_mode = #tpu.pipeline_mode<synchronous>, transform_indices = @transform_6, window_bounds = array<i64: 8, 1>}, {transform_indices = @transform_7, window_bounds = array<i64: 8, 128>}]} {
    %c0 = arith.constant 0 : index
    %c0_0 = arith.constant 0 : index
    %0 = vector.load %arg1[%c0, %c0_0] : memref<128x9xf32, #tpu.memory_space<vmem>>, vector<128x9xf32>
    %c0_1 = arith.constant 0 : index
    %c0_2 = arith.constant 0 : index
    %1 = vector.load %arg2[%c0_1, %c0_2] : memref<160x9xf32, #tpu.memory_space<vmem>>, vector<160x9xf32>
    %cst = arith.constant dense<0.000000e+00> : vector<160x128xf32>
    %2 = tpu.matmul %1, %0, %cst {dimension_numbers = #tpu.dot_dimension_numbers<[1], [1], [0], [0], [0, 0, 1, 0], [], []>} : vector<160x9xf32>, vector<128x9xf32>, vector<160x128xf32> -> vector<160x128xf32>
    %c0_3 = arith.constant 0 : index
    %c0_4 = arith.constant 0 : index
    %3 = vector.load %arg3[%c0_3, %c0_4] : memref<160x1xf32, #tpu.memory_space<vmem>>, vector<160x1xf32>
    %4 = vector.broadcast %3 : vector<160x1xf32> to vector<160x128xf32>
    %5 = arith.addf %2, %4 : vector<160x128xf32>
    %cst_5 = arith.constant 0.000000e+00 : f32
    %6 = vector.broadcast %cst_5 : f32 to vector<160x128xf32>
    %7 = arith.maximumf %5, %6 : vector<160x128xf32>
    %c0_6 = arith.constant 0 : index
    %c0_7 = arith.constant 0 : index
    %8 = vector.load %arg4[%c0_6, %c0_7] : memref<64x160xf32, #tpu.memory_space<vmem>>, vector<64x160xf32>
    %cst_8 = arith.constant dense<0.000000e+00> : vector<64x128xf32>
    %9 = tpu.matmul %8, %7, %cst_8 {dimension_numbers = #tpu.dot_dimension_numbers<[1], [0], [0], [1], [0, 0, 1, 1], [], []>} : vector<64x160xf32>, vector<160x128xf32>, vector<64x128xf32> -> vector<64x128xf32>
    %c0_9 = arith.constant 0 : index
    %c0_10 = arith.constant 0 : index
    %10 = vector.load %arg5[%c0_9, %c0_10] : memref<64x1xf32, #tpu.memory_space<vmem>>, vector<64x1xf32>
    %11 = vector.broadcast %10 : vector<64x1xf32> to vector<64x128xf32>
    %12 = arith.addf %9, %11 : vector<64x128xf32>
    %cst_11 = arith.constant 0.000000e+00 : f32
    %13 = vector.broadcast %cst_11 : f32 to vector<64x128xf32>
    %14 = arith.maximumf %12, %13 : vector<64x128xf32>
    %c0_12 = arith.constant 0 : index
    %c0_13 = arith.constant 0 : index
    %15 = vector.load %arg6[%c0_12, %c0_13] : memref<8x64xf32, #tpu.memory_space<vmem>>, vector<8x64xf32>
    %cst_14 = arith.constant dense<0.000000e+00> : vector<8x128xf32>
    %16 = tpu.matmul %15, %14, %cst_14 {dimension_numbers = #tpu.dot_dimension_numbers<[1], [0], [0], [1], [0, 0, 1, 1], [], []>} : vector<8x64xf32>, vector<64x128xf32>, vector<8x128xf32> -> vector<8x128xf32>
    %c0_15 = arith.constant 0 : index
    %c0_16 = arith.constant 0 : index
    %17 = vector.load %arg7[%c0_15, %c0_16] : memref<8x1xf32, #tpu.memory_space<vmem>>, vector<8x1xf32>
    %18 = vector.broadcast %17 : vector<8x1xf32> to vector<8x128xf32>
    %19 = arith.addf %16, %18 : vector<8x128xf32>
    %c0_17 = arith.constant 0 : index
    %c0_18 = arith.constant 0 : index
    %20 = vector.load %arg8[%c0_17, %c0_18] : memref<8x128xf32, #tpu.memory_space<vmem>>, vector<8x128xf32>
    tpu.vector_store %arg8[%c0_17, %c0_18], %19 {strides = array<i32>} : memref<8x128xf32, #tpu.memory_space<vmem>>, vector<8x128xf32>,
    return
  }
  func.func @transform_0(%arg0: i32) -> (i32, i32) {
    %c0_i32 = arith.constant 0 : i32
    %c0_i32_0 = arith.constant 0 : i32
    return %arg0, %c0_i32 : i32, i32
  }
  func.func @transform_1(%arg0: i32) -> (i32, i32) {
    %c0_i32 = arith.constant 0 : i32
    %c0_i32_0 = arith.constant 0 : i32
    %c0_i32_1 = arith.constant 0 : i32
    return %c0_i32, %c0_i32_0 : i32, i32
  }
  func.func @transform_2(%arg0: i32) -> (i32, i32) {
    %c0_i32 = arith.constant 0 : i32
    %c0_i32_0 = arith.constant 0 : i32
    %c0_i32_1 = arith.constant 0 : i32
    return %c0_i32, %c0_i32_0 : i32, i32
  }
  func.func @transform_3(%arg0: i32) -> (i32, i32) {
    %c0_i32 = arith.constant 0 : i32
    %c0_i32_0 = arith.constant 0 : i32
    %c0_i32_1 = arith.constant 0 : i32
    return %c0_i32, %c0_i32_0 : i32, i32
  }
  func.func @transform_4(%arg0: i32) -> (i32, i32) {
    %c0_i32 = arith.constant 0 : i32
    %c0_i32_0 = arith.constant 0 : i32
    %c0_i32_1 = arith.constant 0 : i32
    return %c0_i32, %c0_i32_0 : i32, i32
  }
  func.func @transform_5(%arg0: i32) -> (i32, i32) {
    %c0_i32 = arith.constant 0 : i32
    %c0_i32_0 = arith.constant 0 : i32
    %c0_i32_1 = arith.constant 0 : i32
    return %c0_i32, %c0_i32_0 : i32, i32
  }
  func.func @transform_6(%arg0: i32) -> (i32, i32) {
    %c0_i32 = arith.constant 0 : i32
    %c0_i32_0 = arith.constant 0 : i32
    %c0_i32_1 = arith.constant 0 : i32
    return %c0_i32, %c0_i32_0 : i32, i32
  }
  func.func @transform_7(%arg0: i32) -> (i32, i32) {
    %c0_i32 = arith.constant 0 : i32
    %c0_i32_0 = arith.constant 0 : i32
    return %c0_i32, %arg0 : i32, i32
  }
}

</mosaic_0001>

<llo_original>
// kernel: pt_mdl_cnn1_forward.1
$region0: #{pt_mdl_cnn1_forward.1}
  #allocation0 [shape = 'u32[]', space=smem, size = 0x4, offset = 0x4, fixed_abs, tag = 'smem constant byte address 0x4 - core index']
  #allocation1 [shape = 'u32[144,128]{1,0:T(1,128)}', space=vmem, size = 0x12000, scoped, tag = 'internal scratch']
  %s0 = inlined_call_operand.vmem [shape: f32[200,9], index: 0, kind: input, shape index: {}]
  %s1 = inlined_call_operand.vmem [shape: f32[160,9], index: 1, kind: input, shape index: {}]
  %s2 = inlined_call_operand.vmem [shape: f32[160,1], index: 2, kind: input, shape index: {}]
  %s3 = inlined_call_operand.vmem [shape: f32[64,160], index: 3, kind: input, shape index: {}]
  %s4 = inlined_call_operand.vmem [shape: f32[64,1], index: 4, kind: input, shape index: {}]
  %s5 = inlined_call_operand.vmem [shape: f32[8,64], index: 5, kind: input, shape index: {}]
  %s6 = inlined_call_operand.vmem [shape: f32[8,1], index: 6, kind: input, shape index: {}]
  %s7 = inlined_call_operand.hbm [shape: f32[8,200], index: 7, kind: output, shape index: {}]
  %s8 = sld [smem:[#allocation0]]
  $region61: #{pt_mdl_cnn1_forward.1} parent=0
    _
  %s10 = ssub.s32 1, %s8
  %s11 = scalar_select 0, %s10, %s8
  $region1: #{pt_mdl_cnn1_forward.1} parent=0
    #allocation2 [shape = 'u8[8192]{0}', space=vmem, size = 0x2000, scoped, tag = 'output window, operand 0']
    #allocation3 [shape = 's32[2]{0}', space=sflag, size = 0x8, scoped, tag = 'scoped memory for pt_mdl_cnn1_forward.1']
    %12 = vsyncpa [#allocation3], 0
    %s13 = scalar_lea.sflag [#allocation3], 1
    %14 = vsyncpa %s13, 0
    loop: start=0, step=1, limit=4
    $region2: #{pt_mdl_cnn1_forward.1} parent=1 // loop_pre_header
      _
    $region3: #{pt_mdl_cnn1_forward.1} parent=1 // loop_header
      %s16 = sphi 0, %s20
      %p17 = scmp.ge.s32.totalorder %s16, 4
      %s26 = sphi 0, %s28
      %s29 = sphi 0, %s26
      %s30 = sphi 0, %s29
      %s46 = sphi 0, %s30
      %s50 = sphi 0, %s50
      %s52 = sphi 0, %s50
      %s53 = sphi 0, %s52
      %s67 = sphi 0, %s53
      %s71 = sphi 0, %s71
      %s73 = sphi 0, %s71
      %s74 = sphi 0, %s73
      %s88 = sphi 0, %s74
      %s92 = sphi 0, %s92
      %s94 = sphi 0, %s92
      %s95 = sphi 0, %s94
      %s109 = sphi 0, %s95
      %s113 = sphi 0, %s113
      %s115 = sphi 0, %s113
      %s116 = sphi 0, %s115
      %s130 = sphi 0, %s116
      %s134 = sphi 0, %s134
      %s136 = sphi 0, %s134
      %s137 = sphi 0, %s136
      %s151 = sphi 0, %s137
      %s155 = sphi 0, %s155
      %s157 = sphi 0, %s155
      %s158 = sphi 0, %s157
      %s172 = sphi 0, %s158
      %s178 = sphi 0, %s180
      %s181 = sphi 0, %s178
      %s182 = sphi 0, %s181
      %s198 = sphi 0, %s182
    $region4: #{pt_mdl_cnn1_forward.1} parent=1 // loop_header_branch
      %19 = sbr.rel (%p17) target = $region8
    $region5: #{pt_mdl_cnn1_forward.1} parent=1 // loop_body
      %s21 = ssub.s32 %s16, 1
      %s22 = ssub.s32 %s16, 2
      %s23 = sadd.s32 %s16, 1
      %s24 = ssub.s32 %s16, %s23
      %p25 = scmp.eq.s32.totalorder %s24, 0
      %s27 = sadd.s32 %s26, 1
      %s28 = scalar_select %p25, %s26, %s27
      %p31 = pneg %p25
      %p32 = scmp.eq.s32.totalorder %s16, 1
      %p33 = por %p31, %p32
      %p34 = scmp.ne.s32.totalorder %s26, %s29
      %p35 = scmp.eq.s32.totalorder %s16, 0
      %p36 = por %p34, %p35
      %p37 = scmp.ne.s32.totalorder %s26, %s29
      %p38 = scmp.eq.s32.totalorder %s21, 1
      %p39 = por %p37, %p38
      %p40 = scmp.ne.s32.totalorder %s29, %s30
      %p41 = scmp.eq.s32.totalorder %s21, 0
      %p42 = por %p40, %p41
      %p43 = scmp.ne.s32.totalorder %s29, %s30
      %p44 = scmp.eq.s32.totalorder %s22, 1
      %p45 = por %p43, %p44
      %p47 = scmp.ne.s32.totalorder %s30, %s46
      %p48 = scmp.eq.s32.totalorder %s22, 0
      %p49 = por %p47, %p48
      %s51 = sadd.s32 %s50, 1
      %p54 = scmp.eq.s32.totalorder %s16, 1
      %p55 = scmp.ne.s32.totalorder %s50, %s52
      %p56 = scmp.eq.s32.totalorder %s16, 0
      %p57 = por %p55, %p56
      %p58 = scmp.ne.s32.totalorder %s50, %s52
      %p59 = scmp.eq.s32.totalorder %s21, 1
      %p60 = por %p58, %p59
      %p61 = scmp.ne.s32.totalorder %s52, %s53
      %p62 = scmp.eq.s32.totalorder %s21, 0
      %p63 = por %p61, %p62
      %p64 = scmp.ne.s32.totalorder %s52, %s53
      %p65 = scmp.eq.s32.totalorder %s22, 1
      %p66 = por %p64, %p65
      %p68 = scmp.ne.s32.totalorder %s53, %s67
      %p69 = scmp.eq.s32.totalorder %s22, 0
      %p70 = por %p68, %p69
      %s72 = sadd.s32 %s71, 1
      %p75 = scmp.eq.s32.totalorder %s16, 1
      %p76 = scmp.ne.s32.totalorder %s71, %s73
      %p77 = scmp.eq.s32.totalorder %s16, 0
      %p78 = por %p76, %p77
      %p79 = scmp.ne.s32.totalorder %s71, %s73
      %p80 = scmp.eq.s32.totalorder %s21, 1
      %p81 = por %p79, %p80
      %p82 = scmp.ne.s32.totalorder %s73, %s74
      %p83 = scmp.eq.s32.totalorder %s21, 0
      %p84 = por %p82, %p83
      %p85 = scmp.ne.s32.totalorder %s73, %s74
      %p86 = scmp.eq.s32.totalorder %s22, 1
      %p87 = por %p85, %p86
      %p89 = scmp.ne.s32.totalorder %s74, %s88
      %p90 = scmp.eq.s32.totalorder %s22, 0
      %p91 = por %p89, %p90
      %s93 = sadd.s32 %s92, 1
      %p96 = scmp.eq.s32.totalorder %s16, 1
      %p97 = scmp.ne.s32.totalorder %s92, %s94
      %p98 = scmp.eq.s32.totalorder %s16, 0
      %p99 = por %p97, %p98
      %p100 = scmp.ne.s32.totalorder %s92, %s94
      %p101 = scmp.eq.s32.totalorder %s21, 1
      %p102 = por %p100, %p101
      %p103 = scmp.ne.s32.totalorder %s94, %s95
      %p104 = scmp.eq.s32.totalorder %s21, 0
      %p105 = por %p103, %p104
      %p106 = scmp.ne.s32.totalorder %s94, %s95
      %p107 = scmp.eq.s32.totalorder %s22, 1
      %p108 = por %p106, %p107
      %p110 = scmp.ne.s32.totalorder %s95, %s109
      %p111 = scmp.eq.s32.totalorder %s22, 0
      %p112 = por %p110, %p111
      %s114 = sadd.s32 %s113, 1
      %p117 = scmp.eq.s32.totalorder %s16, 1
      %p118 = scmp.ne.s32.totalorder %s113, %s115
      %p119 = scmp.eq.s32.totalorder %s16, 0
      %p120 = por %p118, %p119
      %p121 = scmp.ne.s32.totalorder %s113, %s115
      %p122 = scmp.eq.s32.totalorder %s21, 1
      %p123 = por %p121, %p122
      %p124 = scmp.ne.s32.totalorder %s115, %s116
      %p125 = scmp.eq.s32.totalorder %s21, 0
      %p126 = por %p124, %p125
      %p127 = scmp.ne.s32.totalorder %s115, %s116
      %p128 = scmp.eq.s32.totalorder %s22, 1
      %p129 = por %p127, %p128
      %p131 = scmp.ne.s32.totalorder %s116, %s130
      %p132 = scmp.eq.s32.totalorder %s22, 0
      %p133 = por %p131, %p132
      %s135 = sadd.s32 %s134, 1
      %p138 = scmp.eq.s32.totalorder %s16, 1
      %p139 = scmp.ne.s32.totalorder %s134, %s136
      %p140 = scmp.eq.s32.totalorder %s16, 0
      %p141 = por %p139, %p140
      %p142 = scmp.ne.s32.totalorder %s134, %s136
      %p143 = scmp.eq.s32.totalorder %s21, 1
      %p144 = por %p142, %p143
      %p145 = scmp.ne.s32.totalorder %s136, %s137
      %p146 = scmp.eq.s32.totalorder %s21, 0
      %p147 = por %p145, %p146
      %p148 = scmp.ne.s32.totalorder %s136, %s137
      %p149 = scmp.eq.s32.totalorder %s22, 1
      %p150 = por %p148, %p149
      %p152 = scmp.ne.s32.totalorder %s137, %s151
      %p153 = scmp.eq.s32.totalorder %s22, 0
      %p154 = por %p152, %p153
      %s156 = sadd.s32 %s155, 1
      %p159 = scmp.eq.s32.totalorder %s16, 1
      %p160 = scmp.ne.s32.totalorder %s155, %s157
      %p161 = scmp.eq.s32.totalorder %s16, 0
      %p162 = por %p160, %p161
      %p163 = scmp.ne.s32.totalorder %s155, %s157
      %p164 = scmp.eq.s32.totalorder %s21, 1
      %p165 = por %p163, %p164
      %p166 = scmp.ne.s32.totalorder %s157, %s158
      %p167 = scmp.eq.s32.totalorder %s21, 0
      %p168 = por %p166, %p167
      %p169 = scmp.ne.s32.totalorder %s157, %s158
      %p170 = scmp.eq.s32.totalorder %s22, 1
      %p171 = por %p169, %p170
      %p173 = scmp.ne.s32.totalorder %s158, %s172
      %p174 = scmp.eq.s32.totalorder %s22, 0
      %p175 = por %p173, %p174
      %s176 = ssub.s32 %s16, %s23
      %p177 = scmp.eq.s32.totalorder %s176, 0
      %s179 = sadd.s32 %s178, 1
      %s180 = scalar_select %p177, %s178, %s179
      %p183 = pneg %p177
      %p184 = scmp.eq.s32.totalorder %s16, 1
      %p185 = por %p183, %p184
      %p186 = scmp.ne.s32.totalorder %s178, %s181
      %p187 = scmp.eq.s32.totalorder %s16, 0
      %p188 = por %p186, %p187
      %p189 = scmp.ne.s32.totalorder %s178, %s181
      %p190 = scmp.eq.s32.totalorder %s21, 1
      %p191 = por %p189, %p190
      %p192 = scmp.ne.s32.totalorder %s181, %s182
      %p193 = scmp.eq.s32.totalorder %s21, 0
      %p194 = por %p192, %p193
      %p195 = scmp.ne.s32.totalorder %s181, %s182
      %p196 = scmp.eq.s32.totalorder %s22, 1
      %p197 = por %p195, %p196
      %p199 = scmp.ne.s32.totalorder %s182, %s198
      %p200 = scmp.eq.s32.totalorder %s22, 0
      %p201 = por %p199, %p200
      %p202 = scmp.le.s32.totalorder 1, %s16
      %p203 = scmp.lt.s32.totalorder %s16, 3
      %p204 = pnand %p202, %p203
      %p205 = pneg %p204
      // Predicated region
      $region9: #{pt_mdl_cnn1_forward.1} parent=5 // pred_check
        _
      $region10: #{pt_mdl_cnn1_forward.1} parent=5 // pred_check_branch
        %207 = sbr.rel (%p204) target = $region12
      $region11: #{pt_mdl_cnn1_forward.1} parent=5 // pred_region
        %s208 = ssub.s32 %s16, 1
        // Predicated region
        $region13: #{pt_mdl_cnn1_forward.1} parent=11 // pred_check
          %p209 = pneg %p63
        $region14: #{pt_mdl_cnn1_forward.1} parent=11 // pred_check_branch
          %211 = sbr.rel (%p209) target = $region16
        $region15: #{pt_mdl_cnn1_forward.1} parent=11 // pred_region
          _
        $region16: #{pt_mdl_cnn1_forward.1} parent=11 // pred_fallthru
          _
        // Predicated region
        $region17: #{pt_mdl_cnn1_forward.1} parent=11 // pred_check
          %p212 = pneg %p84
        $region18: #{pt_mdl_cnn1_forward.1} parent=11 // pred_check_branch
          %214 = sbr.rel (%p212) target = $region20
        $region19: #{pt_mdl_cnn1_forward.1} parent=11 // pred_region
          _
        $region20: #{pt_mdl_cnn1_forward.1} parent=11 // pred_fallthru
          _
        // Predicated region
        $region21: #{pt_mdl_cnn1_forward.1} parent=11 // pred_check
          %p215 = pneg %p105
        $region22: #{pt_mdl_cnn1_forward.1} parent=11 // pred_check_branch
          %217 = sbr.rel (%p215) target = $region24
        $region23: #{pt_mdl_cnn1_forward.1} parent=11 // pred_region
          _
        $region24: #{pt_mdl_cnn1_forward.1} parent=11 // pred_fallthru
          _
        // Predicated region
        $region25: #{pt_mdl_cnn1_forward.1} parent=11 // pred_check
          %p218 = pneg %p126
        $region26: #{pt_mdl_cnn1_forward.1} parent=11 // pred_check_branch
          %220 = sbr.rel (%p218) target = $region28
        $region27: #{pt_mdl_cnn1_forward.1} parent=11 // pred_region
          _
        $region28: #{pt_mdl_cnn1_forward.1} parent=11 // pred_fallthru
          _
        // Predicated region
        $region29: #{pt_mdl_cnn1_forward.1} parent=11 // pred_check
          %p221 = pneg %p147
        $region30: #{pt_mdl_cnn1_forward.1} parent=11 // pred_check_branch
          %223 = sbr.rel (%p221) target = $region32
        $region31: #{pt_mdl_cnn1_forward.1} parent=11 // pred_region
          _
        $region32: #{pt_mdl_cnn1_forward.1} parent=11 // pred_fallthru
          _
        // Predicated region
        $region33: #{pt_mdl_cnn1_forward.1} parent=11 // pred_check
          %p224 = pneg %p168
        $region34: #{pt_mdl_cnn1_forward.1} parent=11 // pred_check_branch
          %226 = sbr.rel (%p224) target = $region36
        $region35: #{pt_mdl_cnn1_forward.1} parent=11 // pred_region
          _
        $region36: #{pt_mdl_cnn1_forward.1} parent=11 // pred_fallthru
          _
      $region12: #{pt_mdl_cnn1_forward.1} parent=5 // pred_fallthru
        _
      %p227 = scmp.lt.s32.totalorder %s16, 2
      // Predicated region
      $region37: #{pt_mdl_cnn1_forward.1} parent=5 // pred_check
        %p228 = pneg %p227
      $region38: #{pt_mdl_cnn1_forward.1} parent=5 // pred_check_branch
        %230 = sbr.rel (%p228) target = $region40
      $region39: #{pt_mdl_cnn1_forward.1} parent=5 // pred_region
        // Predicated region
        $region41: #{pt_mdl_cnn1_forward.1} parent=39 // pred_check
          %p231 = pneg %p36
        $region42: #{pt_mdl_cnn1_forward.1} parent=39 // pred_check_branch
          %233 = sbr.rel (%p231) target = $region44
        $region43: #{pt_mdl_cnn1_forward.1} parent=39 // pred_region
          %s234 = smul.u32 16, %s16
          %s235 = ssub.s32 25, %s234
          %p236 = scmp.lt.s32.totalorder %s235, 16
          %s237 = scalar_select %p236, %s235, 16
          %s238 = smul.u32 128, %s237
          %p239 = scmp.lt.s32.totalorder %s234, 24
          %s240 = scalar_select %p239, %s234, 24
          %s241 = smul.addr %s240, 8
          %s242 = scalar_lea.vmem %s0, %s241
          %s243 = smul.u32 16, %s16
          %s244 = ssub.s32 25, %s243
          %p245 = scmp.lt.s32.totalorder %s244, 16
          %s246 = scalar_select %p245, %s244, 16
          %s247 = smul.u32 128, %s246
        $region44: #{pt_mdl_cnn1_forward.1} parent=39 // pred_fallthru
          _
      $region40: #{pt_mdl_cnn1_forward.1} parent=5 // pred_fallthru
        _
      %p248 = scmp.le.s32.totalorder 1, %s16
      %p249 = scmp.lt.s32.totalorder %s16, 3
      %p250 = pnand %p248, %p249
      %p251 = pneg %p250
      // Predicated region
      $region45: #{pt_mdl_cnn1_forward.1} parent=5 // pred_check
        _
      $region46: #{pt_mdl_cnn1_forward.1} parent=5 // pred_check_branch
        %253 = sbr.rel (%p250) target = $region48
      $region47: #{pt_mdl_cnn1_forward.1} parent=5 // pred_region
        %s254 = ssub.s32 %s16, 1
        %s255 = smul.u32 16, %s21
        %s256 = ssub.s32 25, %s255
        %p257 = scmp.lt.s32.totalorder %s256, 16
        %s258 = scalar_select %p257, %s256, 16
        %s259 = smul.u32 128, %s258
        %p260 = scmp.lt.s32.totalorder %s255, 24
        %s261 = scalar_select %p260, %s255, 24
        %s262 = smul.addr %s261, 8
        %s263 = scalar_lea.vmem %s0, %s262
        %p264 = pneg %p42
        %p265 = pneg %p39
        %p266 = pneg %p63
        %p267 = pneg %p60
        %p268 = pneg %p84
        %p269 = pneg %p81
        %p270 = pneg %p105
        %p271 = pneg %p102
        %p272 = pneg %p126
        %p273 = pneg %p123
        %p274 = pneg %p147
        %p275 = pneg %p144
        %p276 = pneg %p168
        %p277 = pneg %p165
        %p278 = pneg %p194
        %p279 = pneg %p191
        %s280 = sand.u32 %s181, 1
        %s281 = scalar_lea.sflag [#allocation3], %s280
        %s282 = sand.u32 %s181, 1
        %s283 = smul.addr %s282, 8
        %s284 = scalar_lea.vmem [#allocation2], %s283
        %s285 = smul.u32 16, %s21
        %s286 = ssub.s32 25, %s285
        %p287 = scmp.lt.s32.totalorder %s286, 16
        %s288 = scalar_select %p287, %s286, 16
        %s289 = smul.u32 128, %s288
        %p290 = scmp.lt.s32.totalorder %s285, 24
        %s291 = scalar_select %p290, %s285, 24
        %s292 = smul.addr %s291, 8
        %s293 = scalar_lea.vmem %s0, %s292
        %s294 = smul.u32 16, %s21
        %s295 = ssub.s32 25, %s294
        %p296 = scmp.lt.s32.totalorder %s295, 16
        %s297 = scalar_select %p296, %s295, 16
        %s298 = smul.u32 128, %s297
        %v299 = vld [vmem:[%s293] sm:$0xff]
        %v300 = vld [vmem:[%s293 + $0x8] sm:$0xff]
        %v301 = vld [vmem:[%s293 + $0x10] sm:$0xff]
        %v302 = vld [vmem:[%s293 + $0x18] sm:$0xff]
        %v303 = vld [vmem:[%s293 + $0x20] sm:$0xff]
        %v304 = vld [vmem:[%s293 + $0x28] sm:$0xff]
        %v305 = vld [vmem:[%s293 + $0x30] sm:$0xff]
        %v306 = vld [vmem:[%s293 + $0x38] sm:$0xff]
        %v307 = vld [vmem:[%s293 + $0x40] sm:$0xff]
        %v308 = vld [vmem:[%s293 + $0x48] sm:$0xff]
        %v309 = vld [vmem:[%s293 + $0x50] sm:$0xff]
        %v310 = vld [vmem:[%s293 + $0x58] sm:$0xff]
        %v311 = vld [vmem:[%s293 + $0x60] sm:$0xff]
        %v312 = vld [vmem:[%s293 + $0x68] sm:$0xff]
        %v313 = vld [vmem:[%s293 + $0x70] sm:$0xff]
        %v314 = vld [vmem:[%s293 + $0x78] sm:$0xff]
        %v315 = vld [vmem:[%s1] sm:$0xff]
        %v316 = vld [vmem:[%s1 + $0x8] sm:$0xff]
        %v317 = vld [vmem:[%s1 + $0x10] sm:$0xff]
        %v318 = vld [vmem:[%s1 + $0x18] sm:$0xff]
        %v319 = vld [vmem:[%s1 + $0x20] sm:$0xff]
        %v320 = vld [vmem:[%s1 + $0x28] sm:$0xff]
        %v321 = vld [vmem:[%s1 + $0x30] sm:$0xff]
        %v322 = vld [vmem:[%s1 + $0x38] sm:$0xff]
        %v323 = vld [vmem:[%s1 + $0x40] sm:$0xff]
        %v324 = vld [vmem:[%s1 + $0x48] sm:$0xff]
        %v325 = vld [vmem:[%s1 + $0x50] sm:$0xff]
        %v326 = vld [vmem:[%s1 + $0x58] sm:$0xff]
        %v327 = vld [vmem:[%s1 + $0x60] sm:$0xff]
        %v328 = vld [vmem:[%s1 + $0x68] sm:$0xff]
        %v329 = vld [vmem:[%s1 + $0x70] sm:$0xff]
        %v330 = vld [vmem:[%s1 + $0x78] sm:$0xff]
        %v331 = vld [vmem:[%s1 + $0x80] sm:$0xff]
        %v332 = vld [vmem:[%s1 + $0x88] sm:$0xff]
        %v333 = vld [vmem:[%s1 + $0x90] sm:$0xff]
        %v334 = vld [vmem:[%s1 + $0x98] sm:$0xff]
        %v335 = vld [vmem:[%s2] sm:$0xff]
        %v336 = vld [vmem:[%s2 + $0x8] sm:$0xff]
        %v337 = vld [vmem:[%s2 + $0x10] sm:$0xff]
        %v338 = vld [vmem:[%s2 + $0x18] sm:$0xff]
        %v339 = vld [vmem:[%s2 + $0x20] sm:$0xff]
        %v340 = vld [vmem:[%s2 + $0x28] sm:$0xff]
        %v341 = vld [vmem:[%s2 + $0x30] sm:$0xff]
        %v342 = vld [vmem:[%s2 + $0x38] sm:$0xff]
        %v343 = vld [vmem:[%s2 + $0x40] sm:$0xff]
        %v344 = vld [vmem:[%s2 + $0x48] sm:$0xff]
        %v345 = vld [vmem:[%s2 + $0x50] sm:$0xff]
        %v346 = vld [vmem:[%s2 + $0x58] sm:$0xff]
        %v347 = vld [vmem:[%s2 + $0x60] sm:$0xff]
        %v348 = vld [vmem:[%s2 + $0x68] sm:$0xff]
        %v349 = vld [vmem:[%s2 + $0x70] sm:$0xff]
        %v350 = vld [vmem:[%s2 + $0x78] sm:$0xff]
        %v351 = vld [vmem:[%s2 + $0x80] sm:$0xff]
        %v352 = vld [vmem:[%s2 + $0x88] sm:$0xff]
        %v353 = vld [vmem:[%s2 + $0x90] sm:$0xff]
        %v354 = vld [vmem:[%s2 + $0x98] sm:$0xff]
        %356 = vset.pattern.permute.xlu0 0
        %357 = vperm.xlu0 %356, %v335
        %v358 = vpop.permute.xlu0 %357
        %361 = vset.pattern.permute.xlu0 0
        %362 = vperm.xlu0 %361, %v336
        %v363 = vpop.permute.xlu0 %362
        %366 = vset.pattern.permute.xlu0 0
        %367 = vperm.xlu0 %366, %v337
        %v368 = vpop.permute.xlu0 %367
        %371 = vset.pattern.permute.xlu0 0
        %372 = vperm.xlu0 %371, %v338
        %v373 = vpop.permute.xlu0 %372
        %376 = vset.pattern.permute.xlu0 0
        %377 = vperm.xlu0 %376, %v339
        %v378 = vpop.permute.xlu0 %377
        %381 = vset.pattern.permute.xlu0 0
        %382 = vperm.xlu0 %381, %v340
        %v383 = vpop.permute.xlu0 %382
        %386 = vset.pattern.permute.xlu0 0
        %387 = vperm.xlu0 %386, %v341
        %v388 = vpop.permute.xlu0 %387
        %391 = vset.pattern.permute.xlu0 0
        %392 = vperm.xlu0 %391, %v342
        %v393 = vpop.permute.xlu0 %392
        %396 = vset.pattern.permute.xlu0 0
        %397 = vperm.xlu0 %396, %v343
        %v398 = vpop.permute.xlu0 %397
        %401 = vset.pattern.permute.xlu0 0
        %402 = vperm.xlu0 %401, %v344
        %v403 = vpop.permute.xlu0 %402
        %406 = vset.pattern.permute.xlu0 0
        %407 = vperm.xlu0 %406, %v345
        %v408 = vpop.permute.xlu0 %407
        %411 = vset.pattern.permute.xlu0 0
        %412 = vperm.xlu0 %411, %v346
        %v413 = vpop.permute.xlu0 %412
        %416 = vset.pattern.permute.xlu0 0
        %417 = vperm.xlu0 %416, %v347
        %v418 = vpop.permute.xlu0 %417
        %421 = vset.pattern.permute.xlu0 0
        %422 = vperm.xlu0 %421, %v348
        %v423 = vpop.permute.xlu0 %422
        %426 = vset.pattern.permute.xlu0 0
        %427 = vperm.xlu0 %426, %v349
        %v428 = vpop.permute.xlu0 %427
        %431 = vset.pattern.permute.xlu0 0
        %432 = vperm.xlu0 %431, %v350
        %v433 = vpop.permute.xlu0 %432
        %436 = vset.pattern.permute.xlu0 0
        %437 = vperm.xlu0 %436, %v351
        %v438 = vpop.permute.xlu0 %437
        %441 = vset.pattern.permute.xlu0 0
        %442 = vperm.xlu0 %441, %v352
        %v443 = vpop.permute.xlu0 %442
        %446 = vset.pattern.permute.xlu0 0
        %447 = vperm.xlu0 %446, %v353
        %v448 = vpop.permute.xlu0 %447
        %451 = vset.pattern.permute.xlu0 0
        %452 = vperm.xlu0 %451, %v354
        %v453 = vpop.permute.xlu0 %452
        %vm455 = vcmask 72704
        %v457 = vsel %vm455, %v315, 0
        %v460 = vsel %vm455, %v316, 0
        %v463 = vsel %vm455, %v317, 0
        %v466 = vsel %vm455, %v318, 0
        %v469 = vsel %vm455, %v319, 0
        %v472 = vsel %vm455, %v320, 0
        %v475 = vsel %vm455, %v321, 0
        %v478 = vsel %vm455, %v322, 0
        %v481 = vsel %vm455, %v323, 0
        %v484 = vsel %vm455, %v324, 0
        %v487 = vsel %vm455, %v325, 0
        %v490 = vsel %vm455, %v326, 0
        %v493 = vsel %vm455, %v327, 0
        %v496 = vsel %vm455, %v328, 0
        %v499 = vsel %vm455, %v329, 0
        %v502 = vsel %vm455, %v330, 0
        %v505 = vsel %vm455, %v331, 0
        %v508 = vsel %vm455, %v332, 0
        %v511 = vsel %vm455, %v333, 0
        %v514 = vsel %vm455, %v334, 0
        %v517 = vsel %vm455, %v299, 0
        %v520 = vsel %vm455, %v300, 0
        %v523 = vsel %vm455, %v301, 0
        %v526 = vsel %vm455, %v302, 0
        %v529 = vsel %vm455, %v303, 0
        %v532 = vsel %vm455, %v304, 0
        %v535 = vsel %vm455, %v305, 0
        %v538 = vsel %vm455, %v306, 0
        %v541 = vsel %vm455, %v307, 0
        %v544 = vsel %vm455, %v308, 0
        %v547 = vsel %vm455, %v309, 0
        %v550 = vsel %vm455, %v310, 0
        %v553 = vsel %vm455, %v311, 0
        %v556 = vsel %vm455, %v312, 0
        %v559 = vsel %vm455, %v313, 0
        %v562 = vsel %vm455, %v314, 0
        %564 = vmatprep.subr.mxu0 0.0
        %565 = vmatpush1.xpose.msra.mxu0 %v517
        %566 = vmatprep.subr.mxu0 0.0
        %567 = vmatpush1.xpose.msra.mxu0 %v520
        %568 = vmatprep.subr.mxu0 0.0
        %569 = vmatpush1.xpose.msra.mxu0 %v523
        %570 = vmatprep.subr.mxu0 0.0
        %571 = vmatpush1.xpose.msra.mxu0 %v526
        %572 = vmatprep.subr.mxu0 0.0
        %573 = vmatpush1.xpose.msra.mxu0 %v529
        %574 = vmatprep.subr.mxu0 0.0
        %575 = vmatpush1.xpose.msra.mxu0 %v532
        %576 = vmatprep.subr.mxu0 0.0
        %577 = vmatpush1.xpose.msra.mxu0 %v535
        %578 = vmatprep.subr.mxu0 0.0
        %579 = vmatpush1.xpose.msra.mxu0 %v538
        %580 = vmatprep.subr.mxu0 0.0
        %581 = vmatpush1.xpose.msra.mxu0 %v541
        %582 = vmatprep.subr.mxu0 0.0
        %583 = vmatpush1.xpose.msra.mxu0 %v544
        %584 = vmatprep.subr.mxu0 0.0
        %585 = vmatpush1.xpose.msra.mxu0 %v547
        %586 = vmatprep.subr.mxu0 0.0
        %587 = vmatpush1.xpose.msra.mxu0 %v550
        %588 = vmatprep.subr.mxu0 0.0
        %589 = vmatpush1.xpose.msra.mxu0 %v553
        %590 = vmatprep.subr.mxu0 0.0
        %591 = vmatpush1.xpose.msra.mxu0 %v556
        %592 = vmatprep.subr.mxu0 0.0
        %593 = vmatpush1.xpose.msra.mxu0 %v559
        %594 = vmatprep.subr.mxu0 0.0
        %595 = vmatpush1.xpose.msra.mxu0 %v562
        %596 = vmatprep.subr.mxu0 0.0
        %597 = vmatpush1.xpose.msra.mxu0 0.0
        %598 = vmatprep.subr.mxu0 0.0
        %599 = vmatpush1.xpose.msra.mxu0 0.0
        %600 = vmatprep.subr.mxu0 0.0
        %601 = vmatpush1.xpose.msra.mxu0 0.0
        %602 = vmatprep.subr.mxu0 0.0
        %603 = vmatpush1.xpose.msra.mxu0 0.0
        %604 = vmatprep.subr.mxu0 0.0
        %605 = vmatpush1.xpose.msra.mxu0 0.0
        %606 = vmatprep.subr.mxu0 0.0
        %607 = vmatpush1.xpose.msra.mxu0 0.0
        %608 = vmatprep.subr.mxu0 0.0
        %609 = vmatpush1.xpose.msra.mxu0 0.0
        %610 = vmatprep.subr.mxu0 0.0
        %611 = vmatpush1.xpose.msra.mxu0 0.0
        %612 = vmatprep.subr.mxu0 0.0
        %613 = vmatpush1.xpose.msra.mxu0 0.0
        %614 = vmatprep.subr.mxu0 0.0
        %615 = vmatpush1.xpose.msra.mxu0 0.0
        %616 = vmatprep.subr.mxu0 0.0
        %617 = vmatpush1.xpose.msra.mxu0 0.0
        %618 = vmatprep.subr.mxu0 0.0
        %619 = vmatpush1.xpose.msra.mxu0 0.0
        %620 = vmatprep.subr.mxu0 0.0
        %621 = vmatpush1.xpose.msra.mxu0 0.0
        %622 = vmatprep.subr.mxu0 0.0
        %623 = vmatpush1.xpose.msra.mxu0 0.0
        %624 = vmatprep.subr.mxu0 0.0
        %625 = vmatpush1.xpose.msra.mxu0 0.0
        %626 = vmatprep.subr.mxu0 0.0
        %627 = vmatpush1.xpose.msra.mxu0 0.0
        %628 = vmatprep.mubr.f32.mxu0 0.0
        %629 = vmatmul.mubr.f32.gmra.mrb[0].mxu0 %v457
        %v630 = vpop.f32.mrb[0].mxu0
        %v631 = vadd.f32 %v358, %v630
        %v632 = vpop.f32.mrb[0].mxu0
        %633 = vmatprep.mubr.f32.mxu0 0.0
        %634 = vmatmul.mubr.f32.gmra.mrb[0].mxu0 %v460
        %v635 = vpop.f32.mrb[0].mxu0
        %v636 = vadd.f32 %v363, %v635
        %v637 = vpop.f32.mrb[0].mxu0
        %638 = vmatprep.mubr.f32.mxu0 0.0
        %639 = vmatmul.mubr.f32.gmra.mrb[0].mxu0 %v463
        %v640 = vpop.f32.mrb[0].mxu0
        %v641 = vadd.f32 %v368, %v640
        %v642 = vpop.f32.mrb[0].mxu0
        %643 = vmatprep.mubr.f32.mxu0 0.0
        %644 = vmatmul.mubr.f32.gmra.mrb[0].mxu0 %v466
        %v645 = vpop.f32.mrb[0].mxu0
        %v646 = vadd.f32 %v373, %v645
        %v647 = vpop.f32.mrb[0].mxu0
        %648 = vmatprep.mubr.f32.mxu0 0.0
        %649 = vmatmul.mubr.f32.gmra.mrb[0].mxu0 %v469
        %v650 = vpop.f32.mrb[0].mxu0
        %v651 = vadd.f32 %v378, %v650
        %v652 = vpop.f32.mrb[0].mxu0
        %653 = vmatprep.mubr.f32.mxu0 0.0
        %654 = vmatmul.mubr.f32.gmra.mrb[0].mxu0 %v472
        %v655 = vpop.f32.mrb[0].mxu0
        %v656 = vadd.f32 %v383, %v655
        %v657 = vpop.f32.mrb[0].mxu0
        %658 = vmatprep.mubr.f32.mxu0 0.0
        %659 = vmatmul.mubr.f32.gmra.mrb[0].mxu0 %v475
        %v660 = vpop.f32.mrb[0].mxu0
        %v661 = vadd.f32 %v388, %v660
        %v662 = vpop.f32.mrb[0].mxu0
        %663 = vmatprep.mubr.f32.mxu0 0.0
        %664 = vmatmul.mubr.f32.gmra.mrb[0].mxu0 %v478
        %v665 = vpop.f32.mrb[0].mxu0
        %v666 = vadd.f32 %v393, %v665
        %v667 = vpop.f32.mrb[0].mxu0
        %668 = vmatprep.mubr.f32.mxu0 0.0
        %669 = vmatmul.mubr.f32.gmra.mrb[0].mxu0 %v481
        %v670 = vpop.f32.mrb[0].mxu0
        %v671 = vadd.f32 %v398, %v670
        %v672 = vpop.f32.mrb[0].mxu0
        %673 = vmatprep.mubr.f32.mxu0 0.0
        %674 = vmatmul.mubr.f32.gmra.mrb[0].mxu0 %v484
        %v675 = vpop.f32.mrb[0].mxu0
        %v676 = vadd.f32 %v403, %v675
        %v677 = vpop.f32.mrb[0].mxu0
        %678 = vmatprep.mubr.f32.mxu0 0.0
        %679 = vmatmul.mubr.f32.gmra.mrb[0].mxu0 %v487
        %v680 = vpop.f32.mrb[0].mxu0
        %v681 = vadd.f32 %v408, %v680
        %v682 = vpop.f32.mrb[0].mxu0
        %683 = vmatprep.mubr.f32.mxu0 0.0
        %684 = vmatmul.mubr.f32.gmra.mrb[0].mxu0 %v490
        %v685 = vpop.f32.mrb[0].mxu0
        %v686 = vadd.f32 %v413, %v685
        %v687 = vpop.f32.mrb[0].mxu0
        %688 = vmatprep.mubr.f32.mxu0 0.0
        %689 = vmatmul.mubr.f32.gmra.mrb[0].mxu0 %v493
        %v690 = vpop.f32.mrb[0].mxu0
        %v691 = vadd.f32 %v418, %v690
        %v692 = vpop.f32.mrb[0].mxu0
        %693 = vmatprep.mubr.f32.mxu0 0.0
        %694 = vmatmul.mubr.f32.gmra.mrb[0].mxu0 %v496
        %v695 = vpop.f32.mrb[0].mxu0
        %v696 = vadd.f32 %v423, %v695
        %v697 = vpop.f32.mrb[0].mxu0
        %698 = vmatprep.mubr.f32.mxu0 0.0
        %699 = vmatmul.mubr.f32.gmra.mrb[0].mxu0 %v499
        %v700 = vpop.f32.mrb[0].mxu0
        %v701 = vadd.f32 %v428, %v700
        %v702 = vpop.f32.mrb[0].mxu0
        %703 = vmatprep.mubr.f32.mxu0 0.0
        %704 = vmatmul.mubr.f32.gmra.mrb[0].mxu0 %v502
        %v705 = vpop.f32.mrb[0].mxu0
        %v706 = vadd.f32 %v433, %v705
        %v707 = vpop.f32.mrb[0].mxu0
        %708 = vmatprep.mubr.f32.mxu0 0.0
        %709 = vmatmul.mubr.f32.gmra.mrb[0].mxu0 %v505
        %v710 = vpop.f32.mrb[0].mxu0
        %v711 = vadd.f32 %v438, %v710
        %v712 = vpop.f32.mrb[0].mxu0
        %713 = vmatprep.mubr.f32.mxu0 0.0
        %714 = vmatmul.mubr.f32.gmra.mrb[0].mxu0 %v508
        %v715 = vpop.f32.mrb[0].mxu0
        %v716 = vadd.f32 %v443, %v715
        %v717 = vpop.f32.mrb[0].mxu0
        %718 = vmatprep.mubr.f32.mxu0 0.0
        %719 = vmatmul.mubr.f32.gmra.mrb[0].mxu0 %v511
        %v720 = vpop.f32.mrb[0].mxu0
        %v721 = vadd.f32 %v448, %v720
        %v722 = vpop.f32.mrb[0].mxu0
        %723 = vmatprep.mubr.f32.mxu0 0.0
        %724 = vmatmul.mubr.f32.gmra.mrb[0].mxu0 %v514
        %v725 = vpop.f32.mrb[0].mxu0
        %v726 = vadd.f32 %v453, %v725
        %v727 = vpop.f32.mrb[0].mxu0
        %728 = vdwg.mxu0
        %v729 = vmax.f32 %v631, 0.0
        %v730 = vmax.f32 %v636, 0.0
        %v731 = vmax.f32 %v641, 0.0
        %v732 = vmax.f32 %v646, 0.0
        %v733 = vmax.f32 %v651, 0.0
        %v734 = vmax.f32 %v656, 0.0
        %v735 = vmax.f32 %v661, 0.0
        %v736 = vmax.f32 %v666, 0.0
        %v737 = vmax.f32 %v671, 0.0
        %v738 = vmax.f32 %v676, 0.0
        %v739 = vmax.f32 %v681, 0.0
        %v740 = vmax.f32 %v686, 0.0
        %v741 = vmax.f32 %v691, 0.0
        %v742 = vmax.f32 %v696, 0.0
        %v743 = vmax.f32 %v701, 0.0
        %v744 = vmax.f32 %v706, 0.0
        %v745 = vmax.f32 %v711, 0.0
        %v746 = vmax.f32 %v716, 0.0
        %v747 = vmax.f32 %v721, 0.0
        %v748 = vmax.f32 %v726, 0.0
        %v749 = vld [vmem:[%s3] sm:$0xff]
        %v750 = vld [vmem:[%s3 + $0x8] sm:$0xff]
        %v751 = vld [vmem:[%s3 + $0x10] sm:$0xff]
        %v752 = vld [vmem:[%s3 + $0x18] sm:$0xff]
        %v753 = vld [vmem:[%s3 + $0x20] sm:$0xff]
        %v754 = vld [vmem:[%s3 + $0x28] sm:$0xff]
        %v755 = vld [vmem:[%s3 + $0x30] sm:$0xff]
        %v756 = vld [vmem:[%s3 + $0x38] sm:$0xff]
        %v757 = vld [vmem:[%s3 + $0x40] sm:$0xff]
        %v758 = vld [vmem:[%s3 + $0x48] sm:$0xff]
        %v759 = vld [vmem:[%s3 + $0x50] sm:$0xff]
        %v760 = vld [vmem:[%s3 + $0x58] sm:$0xff]
        %v761 = vld [vmem:[%s3 + $0x60] sm:$0xff]
        %v762 = vld [vmem:[%s3 + $0x68] sm:$0xff]
        %v763 = vld [vmem:[%s3 + $0x70] sm:$0xff]
        %v764 = vld [vmem:[%s3 + $0x78] sm:$0xff]
        %v765 = vld [vmem:[%s4] sm:$0xff]
        %v766 = vld [vmem:[%s4 + $0x8] sm:$0xff]
        %v767 = vld [vmem:[%s4 + $0x10] sm:$0xff]
        %v768 = vld [vmem:[%s4 + $0x18] sm:$0xff]
        %v769 = vld [vmem:[%s4 + $0x20] sm:$0xff]
        %v770 = vld [vmem:[%s4 + $0x28] sm:$0xff]
        %v771 = vld [vmem:[%s4 + $0x30] sm:$0xff]
        %v772 = vld [vmem:[%s4 + $0x38] sm:$0xff]
        %774 = vset.pattern.permute.xlu0 0
        %775 = vperm.xlu0 %774, %v765
        %v776 = vpop.permute.xlu0 %775
        %779 = vset.pattern.permute.xlu0 0
        %780 = vperm.xlu0 %779, %v766
        %v781 = vpop.permute.xlu0 %780
        %784 = vset.pattern.permute.xlu0 0
        %785 = vperm.xlu0 %784, %v767
        %v786 = vpop.permute.xlu0 %785
        %789 = vset.pattern.permute.xlu0 0
        %790 = vperm.xlu0 %789, %v768
        %v791 = vpop.permute.xlu0 %790
        %794 = vset.pattern.permute.xlu0 0
        %795 = vperm.xlu0 %794, %v769
        %v796 = vpop.permute.xlu0 %795
        %799 = vset.pattern.permute.xlu0 0
        %800 = vperm.xlu0 %799, %v770
        %v801 = vpop.permute.xlu0 %800
        %804 = vset.pattern.permute.xlu0 0
        %805 = vperm.xlu0 %804, %v771
        %v806 = vpop.permute.xlu0 %805
        %809 = vset.pattern.permute.xlu0 0
        %810 = vperm.xlu0 %809, %v772
        %v811 = vpop.permute.xlu0 %810
        %vm813 = vcmask 261120
        %v815 = vsel %vm813, %v750, 0
        %v818 = vsel %vm813, %v752, 0
        %v821 = vsel %vm813, %v754, 0
        %v824 = vsel %vm813, %v756, 0
        %v827 = vsel %vm813, %v758, 0
        %v830 = vsel %vm813, %v760, 0
        %v833 = vsel %vm813, %v762, 0
        %v836 = vsel %vm813, %v764, 0
        %838 = vmatprep.subr.mxu0 0.0
        %839 = vmatpush1.msra.mxu0 %v729
        %840 = vmatprep.subr.mxu0 0.0
        %841 = vmatpush1.msra.mxu0 %v730
        %842 = vmatprep.subr.mxu0 0.0
        %843 = vmatpush1.msra.mxu0 %v731
        %844 = vmatprep.subr.mxu0 0.0
        %845 = vmatpush1.msra.mxu0 %v732
        %846 = vmatprep.subr.mxu0 0.0
        %847 = vmatpush1.msra.mxu0 %v733
        %848 = vmatprep.subr.mxu0 0.0
        %849 = vmatpush1.msra.mxu0 %v734
        %850 = vmatprep.subr.mxu0 0.0
        %851 = vmatpush1.msra.mxu0 %v735
        %852 = vmatprep.subr.mxu0 0.0
        %853 = vmatpush1.msra.mxu0 %v736
        %854 = vmatprep.subr.mxu0 0.0
        %855 = vmatpush1.msra.mxu0 %v737
        %856 = vmatprep.subr.mxu0 0.0
        %857 = vmatpush1.msra.mxu0 %v738
        %858 = vmatprep.subr.mxu0 0.0
        %859 = vmatpush1.msra.mxu0 %v739
        %860 = vmatprep.subr.mxu0 0.0
        %861 = vmatpush1.msra.mxu0 %v740
        %862 = vmatprep.subr.mxu0 0.0
        %863 = vmatpush1.msra.mxu0 %v741
        %864 = vmatprep.subr.mxu0 0.0
        %865 = vmatpush1.msra.mxu0 %v742
        %866 = vmatprep.subr.mxu0 0.0
        %867 = vmatpush1.msra.mxu0 %v743
        %868 = vmatprep.subr.mxu0 0.0
        %869 = vmatpush1.msra.mxu0 %v744
        %870 = vmatprep.subr.mxu0 0.0
        %871 = vmatpush1.msra.mxu0 %v745
        %872 = vmatprep.subr.mxu0 0.0
        %873 = vmatpush1.msra.mxu0 %v746
        %874 = vmatprep.subr.mxu0 0.0
        %875 = vmatpush1.msra.mxu0 %v747
        %876 = vmatprep.subr.mxu0 0.0
        %877 = vmatpush1.msra.mxu0 %v748
        %878 = vmatprep.subr.mxu0 0.0
        %879 = vmatpush1.msra.mxu0 0.0
        %880 = vmatprep.subr.mxu0 0.0
        %881 = vmatpush1.msra.mxu0 0.0
        %882 = vmatprep.subr.mxu0 0.0
        %883 = vmatpush1.msra.mxu0 0.0
        %884 = vmatprep.subr.mxu0 0.0
        %885 = vmatpush1.msra.mxu0 0.0
        %886 = vmatprep.subr.mxu0 0.0
        %887 = vmatpush1.msra.mxu0 0.0
        %888 = vmatprep.subr.mxu0 0.0
        %889 = vmatpush1.msra.mxu0 0.0
        %890 = vmatprep.subr.mxu0 0.0
        %891 = vmatpush1.msra.mxu0 0.0
        %892 = vmatprep.subr.mxu0 0.0
        %893 = vmatpush1.msra.mxu0 0.0
        %894 = vmatprep.subr.mxu0 0.0
        %895 = vmatpush1.msra.mxu0 0.0
        %896 = vmatprep.subr.mxu0 0.0
        %897 = vmatpush1.msra.mxu0 0.0
        %898 = vmatprep.subr.mxu0 0.0
        %899 = vmatpush1.msra.mxu0 0.0
        %900 = vmatprep.subr.mxu0 0.0
        %901 = vmatpush1.msra.mxu0 0.0
        %902 = vmatprep.mubr.f32.mxu0 %v815
        %903 = vmatmul.mubr.f32.gmra.mrb[0].mxu0 %v749
        %v904 = vpop.f32.mrb[0].mxu0
        %v905 = vadd.f32 %v776, %v904
        %v906 = vpop.f32.mrb[0].mxu0
        %907 = vmatprep.mubr.f32.mxu0 %v818
        %908 = vmatmul.mubr.f32.gmra.mrb[0].mxu0 %v751
        %v909 = vpop.f32.mrb[0].mxu0
        %v910 = vadd.f32 %v781, %v909
        %v911 = vpop.f32.mrb[0].mxu0
        %912 = vmatprep.mubr.f32.mxu0 %v821
        %913 = vmatmul.mubr.f32.gmra.mrb[0].mxu0 %v753
        %v914 = vpop.f32.mrb[0].mxu0
        %v915 = vadd.f32 %v786, %v914
        %v916 = vpop.f32.mrb[0].mxu0
        %917 = vmatprep.mubr.f32.mxu0 %v824
        %918 = vmatmul.mubr.f32.gmra.mrb[0].mxu0 %v755
        %v919 = vpop.f32.mrb[0].mxu0
        %v920 = vadd.f32 %v791, %v919
        %v921 = vpop.f32.mrb[0].mxu0
        %922 = vmatprep.mubr.f32.mxu0 %v827
        %923 = vmatmul.mubr.f32.gmra.mrb[0].mxu0 %v757
        %v924 = vpop.f32.mrb[0].mxu0
        %v925 = vadd.f32 %v796, %v924
        %v926 = vpop.f32.mrb[0].mxu0
        %927 = vmatprep.mubr.f32.mxu0 %v830
        %928 = vmatmul.mubr.f32.gmra.mrb[0].mxu0 %v759
        %v929 = vpop.f32.mrb[0].mxu0
        %v930 = vadd.f32 %v801, %v929
        %v931 = vpop.f32.mrb[0].mxu0
        %932 = vmatprep.mubr.f32.mxu0 %v833
        %933 = vmatmul.mubr.f32.gmra.mrb[0].mxu0 %v761
        %v934 = vpop.f32.mrb[0].mxu0
        %v935 = vadd.f32 %v806, %v934
        %v936 = vpop.f32.mrb[0].mxu0
        %937 = vmatprep.mubr.f32.mxu0 %v836
        %938 = vmatmul.mubr.f32.gmra.mrb[0].mxu0 %v763
        %v939 = vpop.f32.mrb[0].mxu0
        %v940 = vadd.f32 %v811, %v939
        %v941 = vpop.f32.mrb[0].mxu0
        %942 = vdwg.mxu0
        %v943 = vmax.f32 %v905, 0.0
        %v944 = vmax.f32 %v910, 0.0
        %v945 = vmax.f32 %v915, 0.0
        %v946 = vmax.f32 %v920, 0.0
        %v947 = vmax.f32 %v925, 0.0
        %v948 = vmax.f32 %v930, 0.0
        %v949 = vmax.f32 %v935, 0.0
        %v950 = vmax.f32 %v940, 0.0
        %v951 = vld [vmem:[%s5] sm:$0xff]
        %v952 = vld [vmem:[%s6] sm:$0xff]
        %954 = vset.pattern.permute.xlu0 0
        %955 = vperm.xlu0 %954, %v952
        %v956 = vpop.permute.xlu0 %955
        %vm958 = vcmask 523264
        %v960 = vsel %vm958, %v951, 0
        %962 = vmatprep.subr.mxu0 0.0
        %963 = vmatpush1.msra.mxu0 %v943
        %964 = vmatprep.subr.mxu0 0.0
        %965 = vmatpush1.msra.mxu0 %v944
        %966 = vmatprep.subr.mxu0 0.0
        %967 = vmatpush1.msra.mxu0 %v945
        %968 = vmatprep.subr.mxu0 0.0
        %969 = vmatpush1.msra.mxu0 %v946
        %970 = vmatprep.subr.mxu0 0.0
        %971 = vmatpush1.msra.mxu0 %v947
        %972 = vmatprep.subr.mxu0 0.0
        %973 = vmatpush1.msra.mxu0 %v948
        %974 = vmatprep.subr.mxu0 0.0
        %975 = vmatpush1.msra.mxu0 %v949
        %976 = vmatprep.subr.mxu0 0.0
        %977 = vmatpush1.msra.mxu0 %v950
        %978 = vmatprep.subr.mxu0 0.0
        %979 = vmatpush1.msra.mxu0 0.0
        %980 = vmatprep.subr.mxu0 0.0
        %981 = vmatpush1.msra.mxu0 0.0
        %982 = vmatprep.subr.mxu0 0.0
        %983 = vmatpush1.msra.mxu0 0.0
        %984 = vmatprep.subr.mxu0 0.0
        %985 = vmatpush1.msra.mxu0 0.0
        %986 = vmatprep.subr.mxu0 0.0
        %987 = vmatpush1.msra.mxu0 0.0
        %988 = vmatprep.subr.mxu0 0.0
        %989 = vmatpush1.msra.mxu0 0.0
        %990 = vmatprep.subr.mxu0 0.0
        %991 = vmatpush1.msra.mxu0 0.0
        %992 = vmatprep.subr.mxu0 0.0
        %993 = vmatpush1.msra.mxu0 0.0
        %994 = vmatprep.subr.mxu0 0.0
        %995 = vmatpush1.msra.mxu0 0.0
        %996 = vmatprep.subr.mxu0 0.0
        %997 = vmatpush1.msra.mxu0 0.0
        %998 = vmatprep.subr.mxu0 0.0
        %999 = vmatpush1.msra.mxu0 0.0
        %1000 = vmatprep.subr.mxu0 0.0
        %1001 = vmatpush1.msra.mxu0 0.0
        %1002 = vmatprep.subr.mxu0 0.0
        %1003 = vmatpush1.msra.mxu0 0.0
        %1004 = vmatprep.subr.mxu0 0.0
        %1005 = vmatpush1.msra.mxu0 0.0
        %1006 = vmatprep.subr.mxu0 0.0
        %1007 = vmatpush1.msra.mxu0 0.0
        %1008 = vmatprep.subr.mxu0 0.0
        %1009 = vmatpush1.msra.mxu0 0.0
        %1010 = vmatprep.subr.mxu0 0.0
        %1011 = vmatpush1.msra.mxu0 0.0
        %1012 = vmatprep.subr.mxu0 0.0
        %1013 = vmatpush1.msra.mxu0 0.0
        %1014 = vmatprep.subr.mxu0 0.0
        %1015 = vmatpush1.msra.mxu0 0.0
        %1016 = vmatprep.subr.mxu0 0.0
        %1017 = vmatpush1.msra.mxu0 0.0
        %1018 = vmatprep.subr.mxu0 0.0
        %1019 = vmatpush1.msra.mxu0 0.0
        %1020 = vmatprep.subr.mxu0 0.0
        %1021 = vmatpush1.msra.mxu0 0.0
        %1022 = vmatprep.subr.mxu0 0.0
        %1023 = vmatpush1.msra.mxu0 0.0
        %1024 = vmatprep.subr.mxu0 0.0
        %1025 = vmatpush1.msra.mxu0 0.0
        %1026 = vmatprep.mubr.f32.mxu0 0.0
        %1027 = vmatmul.mubr.f32.gmra.mrb[0].mxu0 %v960
        %v1028 = vpop.f32.mrb[0].mxu0
        %v1029 = vadd.f32 %v956, %v1028
        %v1030 = vpop.f32.mrb[0].mxu0
        %1031 = vdwg.mxu0
        %1032 = vst [vmem:[%s284] sm:$0xff] %v1029
        %s1033 = sand.u32 %s181, 1
        %s1034 = scalar_lea.sflag [#allocation3], %s1033
        %s1035 = sand.u32 %s181, 1
        %s1036 = smul.addr %s1035, 8
        %s1037 = scalar_lea.vmem [#allocation2], %s1036
        // Predicated region
        $region49: #{pt_mdl_cnn1_forward.1} parent=47 // pred_check
          %p1038 = pneg %p191
        $region50: #{pt_mdl_cnn1_forward.1} parent=47 // pred_check_branch
          %1040 = sbr.rel (%p1038) target = $region52
        $region51: #{pt_mdl_cnn1_forward.1} parent=47 // pred_region
          %s1042 = ssub.s32 128, 128
          %1043 = vsyncadd %s1034, %s1042
          %s1044 = smul.addr %s21, 128
          %s1045 = scalar_lea.hbm %s7, %s1044
          %s1047 = sshll.u32 %s1037, 4
          %s1048 = int_to_ptr.vmem [resolvable:$true] %s1047
          %1050 = dma.vmem_to_hbm [thread:$0]  %s1048, 128, %s1045, %s1034
        $region52: #{pt_mdl_cnn1_forward.1} parent=47 // pred_fallthru
          _
      $region48: #{pt_mdl_cnn1_forward.1} parent=5 // pred_fallthru
        _
      %p1051 = scmp.le.s32.totalorder 2, %s16
      // Predicated region
      $region53: #{pt_mdl_cnn1_forward.1} parent=5 // pred_check
        %p1052 = pneg %p1051
      $region54: #{pt_mdl_cnn1_forward.1} parent=5 // pred_check_branch
        %1054 = sbr.rel (%p1052) target = $region56
      $region55: #{pt_mdl_cnn1_forward.1} parent=5 // pred_region
        %s1055 = ssub.s32 %s16, 2
        // Predicated region
        $region57: #{pt_mdl_cnn1_forward.1} parent=55 // pred_check
          %p1056 = pneg %p197
        $region58: #{pt_mdl_cnn1_forward.1} parent=55 // pred_check_branch
          %1058 = sbr.rel (%p1056) target = $region60
        $region59: #{pt_mdl_cnn1_forward.1} parent=55 // pred_region
          %s1059 = sand.u32 %s182, 1
          %s1060 = scalar_lea.sflag [#allocation3], %s1059
          %s1061 = sand.u32 %s182, 1
          %s1062 = smul.addr %s1061, 8
          %s1063 = scalar_lea.vmem [#allocation2], %s1062
          %1064 = dma.done %s1060, 128
        $region60: #{pt_mdl_cnn1_forward.1} parent=55 // pred_fallthru
          _
      $region56: #{pt_mdl_cnn1_forward.1} parent=5 // pred_fallthru
        _
    $region6: #{pt_mdl_cnn1_forward.1} parent=1 // loop_footer
      %s20 = sadd.s32 1, %s16
    $region7: #{pt_mdl_cnn1_forward.1} parent=1 // loop_footer_branch
      %15 = sbr.rel target = $region3
    $region8: #{pt_mdl_cnn1_forward.1} parent=1 // loop_exit
      _
    %1065 = vsyncpa [#allocation3], 1
    %s1066 = scalar_lea.sflag [#allocation3], 1
    %1067 = vsyncpa %s1066, 1

</llo_original>
